<compile_context>
chip_gen: v7x
topology: tpu7x:2x2x1
jax: 0.10.0
libtpu: 0.0.40
codegen_flags: <defaults>
</compile_context>

<pallas_src>
import functools
import math

import jax
import jax.numpy as jnp
from jax.experimental import pallas as pl
from jax.experimental.pallas import tpu as pltpu

_VMEM = pl.BlockSpec(memory_space=pltpu.MemorySpace.VMEM)
_NT = (((1,), (1,)), ((), ()))     # lax.dot_general dims: contract the minor dims (A @ B^T)
_VMEM_LIMIT = 32 * 1024 * 1024     # explicit scoped-VMEM budget (fits v5e/v6e/v7x defaults)


def _round_up(x, m):
    return ((x + m - 1) // m) * m


# --------------------------- Gram matrix  G = W W^T --------------------------- #

def _gram_kernel(wt_ref, g_ref):
    @pl.when(pl.program_id(0) == 0)
    def _init():
        g_ref[...] = jnp.zeros_like(g_ref)

    w = wt_ref[...]                                            # [C, tk] bf16
    g_ref[...] += jax.lax.dot_general(w, w, _NT, preferred_element_type=jnp.float32)


def gram_matrix(wt, tk):
    C, Dp = wt.shape
    nk = Dp // tk
    return pl.pallas_call(
        _gram_kernel,
        out_shape=jax.ShapeDtypeStruct((C, C), jnp.float32),
        grid=(nk,),
        in_specs=[pl.BlockSpec((C, tk), lambda k: (0, k))],
        out_specs=pl.BlockSpec((C, C), lambda k: (0, 0)),
        compiler_params=pltpu.CompilerParams(
            dimension_semantics=("arbitrary",),
            vmem_limit_bytes=_VMEM_LIMIT),
    )(wt)


# ----------------------- Fused VAT kernel (per-row KL out) -------------------- #

def _vat_fused_kernel(x_ref, d_ref, wt_ref, b_ref, g_ref, kl_ref,
                      logits_acc, u_acc, dsq_acc, *, xi, eps, ip):
    k = pl.program_id(1)
    nk = pl.num_programs(1)

    @pl.when(k == 0)
    def _init():
        logits_acc[...] = jnp.zeros_like(logits_acc)
        u_acc[...] = jnp.zeros_like(u_acc)
        dsq_acc[...] = jnp.zeros_like(dsq_acc)

    x = x_ref[...]                                             # [tb, tk] bf16
    d = d_ref[...]                                             # [tb, tk] bf16
    w = wt_ref[...]                                            # [C,  tk] bf16
    logits_acc[...] += jax.lax.dot_general(x, w, _NT, preferred_element_type=jnp.float32)
    u_acc[...] += jax.lax.dot_general(d, w, _NT, preferred_element_type=jnp.float32)
    d32 = d.astype(jnp.float32)
    dsq_acc[...] += jnp.sum(d32 * d32, axis=-1, keepdims=True)

    @pl.when(k == nk - 1)
    def _epilogue():
        logits_base = logits_acc[...] + b_ref[...]             # [tb, C] f32
        m0 = jnp.max(logits_base, axis=-1, keepdims=True)
        sh0 = logits_base - m0
        e0 = jnp.exp(sh0)
        s0 = jnp.sum(e0, axis=-1, keepdims=True)
        pred = e0 / s0                                         # softmax(model(data)), no grad
        logp_pred = sh0 - jnp.log(s0)                          # reused in KL (no log(pred) NaN)

        gram = g_ref[...]                                      # [C, C] f32,  G = W W^T
        # u = _l2_normalize(d0) @ W^T
        u = u_acc[...] * (1.0 / (jnp.sqrt(dsq_acc[...]) + 1e-8))

        for _ in range(ip):                                    # static unroll (ip is small)
            lp = logits_base + xi * u                          # model(data + xi*d)
            mp = jnp.max(lp, axis=-1, keepdims=True)
            ep = jnp.exp(lp - mp)
            phat = ep / jnp.sum(ep, axis=-1, keepdims=True)
            g = phat - pred                                    # grad wrt logits (scale dropped)
            gG = jnp.dot(g, gram, preferred_element_type=jnp.float32)
            # ||g @ W||^2 = g . (g @ G);   u <- _l2_normalize(g @ W) @ W^T
            nrm2 = jnp.maximum(jnp.sum(gG * g, axis=-1, keepdims=True), 0.0)
            u = gG * (1.0 / (jnp.sqrt(nrm2) + 1e-8))

        la = logits_base + eps * u                             # model(data + eps*d_adv)
        ma = jnp.max(la, axis=-1, keepdims=True)
        sha = la - ma
        logp_adv = sha - jnp.log(jnp.sum(jnp.exp(sha), axis=-1, keepdims=True))
        # per-row KL contribution; batchmean division happens in the combine kernel
        kl_ref[...] = jnp.sum(pred * (logp_pred - logp_adv), axis=-1, keepdims=True)


def vat_kl_rows(x, d0, wt, b, gram, *, tb, tk, xi, eps, ip):
    Bp, Dp = x.shape
    C = wt.shape[0]
    nb, nk = Bp // tb, Dp // tk
    return pl.pallas_call(
        functools.partial(_vat_fused_kernel, xi=float(xi), eps=float(eps), ip=int(ip)),
        out_shape=jax.ShapeDtypeStruct((Bp, 1), jnp.float32),
        grid=(nb, nk),
        in_specs=[
            pl.BlockSpec((tb, tk), lambda i, k: (i, k)),       # x
            pl.BlockSpec((tb, tk), lambda i, k: (i, k)),       # d0 (raw noise)
            pl.BlockSpec((C, tk), lambda i, k: (0, k)),        # W (torch layout [C, D])
            pl.BlockSpec((1, C), lambda i, k: (0, 0)),         # bias
            pl.BlockSpec((C, C), lambda i, k: (0, 0)),         # Gram
        ],
        out_specs=pl.BlockSpec((tb, 1), lambda i, k: (i, 0)),
        scratch_shapes=[
            pltpu.VMEM((tb, C), jnp.float32),                  # logits accumulator
            pltpu.VMEM((tb, C), jnp.float32),                  # d @ W^T accumulator
            pltpu.VMEM((tb, 1), jnp.float32),                  # ||d||^2 accumulator
        ],
        compiler_params=pltpu.CompilerParams(
            dimension_semantics=("parallel", "arbitrary"),
            vmem_limit_bytes=_VMEM_LIMIT),
    )(x, d0, wt, b, gram)


# --------------------- Proportion loss + final combination -------------------- #

def _combine_kernel(kl_ref, inp_ref, tgt_ref, wgt_ref, alpha_ref, out_ref,
                    *, batch, nbags, eps_clip):
    # lds = F.kl_div(logp_hat, pred, reduction='batchmean'); padded rows are exactly 0.
    lds = jnp.sum(kl_ref[...], keepdims=True) / batch                       # (1, 1)
    # cross_entropy_loss(input, target, eps): -target * log(clamp(input, eps, 1-eps))
    p = jnp.clip(inp_ref[...], eps_clip, 1.0 - eps_clip)
    ce = -tgt_ref[...] * jnp.log(p)                                         # [NB, C]
    per_bag = jnp.sum(ce, axis=-1, keepdims=True)                           # [NB, 1]
    w = wgt_ref[...]                                                        # [NB, 1]
    prop = jnp.sum(w * per_bag, keepdims=True) / nbags                      # (weight*prop).mean()
    wmean = jnp.sum(w, keepdims=True) / nbags                               # weight.mean(dim=-1)
    out_ref[...] = prop + (alpha_ref[...] * wmean) * lds


def combine_loss(kl_rows, inp, target, weight_col, alpha11, *, batch):
    nb = inp.shape[0]
    return pl.pallas_call(
        functools.partial(_combine_kernel, batch=float(batch), nbags=float(nb),
                          eps_clip=1e-8),
        out_shape=jax.ShapeDtypeStruct((1, 1), jnp.float32),
        in_specs=[_VMEM] * 5,
        out_specs=_VMEM,
    )(kl_rows, inp, target, weight_col, alpha11)


# ------------------------------- Loss module ---------------------------------- #

class LLPVATLoss:
    """VAT loss + weighted LLP proportion loss (forward only).

    model_params = (W, b): deterministic linear classifier in torch.nn.Linear layout,
    W [num_classes, D], b [1, num_classes];  logits = flatten(data) @ W^T + b.
    """

    def __init__(self, xi=10.0, eps=1.0, ip=1):
        self.xi = xi
        self.eps = eps
        self.ip = ip

    def __call__(self, model_params, data, alpha, inp, target, weight, noise_key):
        wt, b = model_params
        B = data.shape[0]
        D = math.prod(data.shape[1:])
        C = wt.shape[0]

        # ---- tiling: batch axis "parallel" (megacore), feature-K axis "arbitrary" ----
        B_pad = _round_up(B, 8)
        tb = next(t for t in (512, 256, 128, 64, 32, 16, 8) if B_pad % t == 0)
        D_pad = _round_up(D, 128)
        tk = next(t for t in (1024, 512, 256, 128) if D_pad % t == 0)

        # bf16 streaming of the big [B, D] / [C, D] operands; f32 accumulation in-kernel.
        x = data.reshape(B, D).astype(jnp.bfloat16)
        d0 = jax.random.normal(noise_key, (B, D), dtype=jnp.float32).astype(jnp.bfloat16)
        if (B_pad, D_pad) != (B, D):
            # Zero padding: padded rows contribute exactly 0 to the KL sum and padded
            # feature columns contribute nothing to logits / noise norms.
            x = jnp.pad(x, ((0, B_pad - B), (0, D_pad - D)))
            d0 = jnp.pad(d0, ((0, B_pad - B), (0, D_pad - D)))
        wt_b = wt.astype(jnp.bfloat16)
        if D_pad != D:
            wt_b = jnp.pad(wt_b, ((0, 0), (0, D_pad - D)))
        b32 = jnp.reshape(b, (1, C)).astype(jnp.float32)

        # TODO(synk): _disable_tracking_bn_stats is a no-op here (no BatchNorm in the
        # synthetic linear model).
        gram = gram_matrix(wt_b, tk)                             # G = W W^T, [C, C] f32
        kl_rows = vat_kl_rows(x, d0, wt_b, b32, gram,
                              tb=tb, tk=tk, xi=self.xi, eps=self.eps, ip=self.ip)

        loss = combine_loss(kl_rows,
                            inp.astype(jnp.float32),
                            target.astype(jnp.float32),
                            jnp.reshape(weight, (-1, 1)).astype(jnp.float32),
                            jnp.reshape(alpha, (1, 1)).astype(jnp.float32),
                            batch=B)
        return loss[0, 0]


# ---------------------------------- Demo --------------------------------------- #

if __name__ == "__main__":
    key = jax.random.PRNGKey(0)
    k_data, k_w, k_b, k_in, k_tg, k_wt, k_noise = jax.random.split(key, 7)

    B, C_in, H, W_sp = 2, 4, 16, 16
    num_classes = 8
    D = C_in * H * W_sp

    # NCHW input, like PyTorch.
    data = jax.random.normal(k_data, (B, C_in, H, W_sp), dtype=jnp.float32)

    # Deterministic synthetic linear classifier (torch.nn.Linear weight layout).
    W_param = jax.random.normal(k_w, (num_classes, D), dtype=jnp.float32) * 0.02
    b_param = jax.random.normal(k_b, (1, num_classes), dtype=jnp.float32) * 0.01

    # Bag-level predicted / target proportions and per-bag weights.
    inp = jax.nn.softmax(jax.random.normal(k_in, (B, num_classes), dtype=jnp.float32), axis=-1)
    target = jax.nn.softmax(jax.random.normal(k_tg, (B, num_classes), dtype=jnp.float32), axis=-1)
    weight = jax.random.uniform(k_wt, (B,), dtype=jnp.float32)
    alpha = jnp.float32(0.5)

    loss_fn = LLPVATLoss(xi=10.0, eps=1.0, ip=1)
    loss = loss_fn((W_param, b_param), data, alpha, inp, target, weight, k_noise)
    loss = jax.block_until_ready(loss)
    assert loss.shape == () and bool(jnp.isfinite(loss))
    print("KERNEL_OK")
</pallas_src>

<mosaic_0001>
module attributes {stable_mosaic.version = 11 : i64} {
  func.func @_gram_kernel(%arg0: i32, %arg1: memref<8x1024xbf16, #tpu.memory_space<vmem>>, %arg2: memref<8x8xf32, #tpu.memory_space<vmem>>) attributes {dimension_semantics = [#tpu.dimension_semantics<arbitrary>], iteration_bounds = array<i64: 1>, scalar_prefetch = 0 : i64, scratch_operands = 0 : i64, tpu.core_type = #tpu.core_type<tc>, window_params = [{transform_indices = @transform_0, window_bounds = array<i64: 8, 1024>}, {pipeline_mode = #tpu.pipeline_mode<synchronous>, transform_indices = @transform_1, window_bounds = array<i64: 8, 8>}]} {
    %c0_i32 = arith.constant 0 : i32
    %0 = arith.cmpi eq, %arg0, %c0_i32 : i32
    %1 = arith.extui %0 : i1 to i32
    %c0_i32_0 = arith.constant 0 : i32
    %2 = arith.cmpi ne, %1, %c0_i32_0 : i32
    scf.if %2 {
      %cst_6 = arith.constant 0.000000e+00 : f32
      %8 = vector.broadcast %cst_6 : f32 to vector<8x8xf32>
      %c0_7 = arith.constant 0 : index
      %c0_8 = arith.constant 0 : index
      %9 = vector.load %arg2[%c0_7, %c0_8] : memref<8x8xf32, #tpu.memory_space<vmem>>, vector<8x8xf32>
      tpu.vector_store %arg2[%c0_7, %c0_8], %8 {strides = array<i32>} : memref<8x8xf32, #tpu.memory_space<vmem>>, vector<8x8xf32>,
    } else {
    }
    %c0 = arith.constant 0 : index
    %c0_1 = arith.constant 0 : index
    %3 = vector.load %arg1[%c0, %c0_1] : memref<8x1024xbf16, #tpu.memory_space<vmem>>, vector<8x1024xbf16>
    %c0_2 = arith.constant 0 : index
    %c0_3 = arith.constant 0 : index
    %4 = vector.load %arg2[%c0_2, %c0_3] : memref<8x8xf32, #tpu.memory_space<vmem>>, vector<8x8xf32>
    %cst = arith.constant dense<0.000000e+00> : vector<8x8xf32>
    %5 = tpu.matmul %3, %3, %cst {dimension_numbers = #tpu.dot_dimension_numbers<[1], [1], [0], [0], [0, 0, 1, 0], [], []>} : vector<8x1024xbf16>, vector<8x1024xbf16>, vector<8x8xf32> -> vector<8x8xf32>
    %6 = arith.addf %4, %5 : vector<8x8xf32>
    %c0_4 = arith.constant 0 : index
    %c0_5 = arith.constant 0 : index
    %7 = vector.load %arg2[%c0_4, %c0_5] : memref<8x8xf32, #tpu.memory_space<vmem>>, vector<8x8xf32>
    tpu.vector_store %arg2[%c0_4, %c0_5], %6 {strides = array<i32>} : memref<8x8xf32, #tpu.memory_space<vmem>>, vector<8x8xf32>,
    return
  }
  func.func @transform_0(%arg0: i32) -> (i32, i32) {
    %c0_i32 = arith.constant 0 : i32
    %c0_i32_0 = arith.constant 0 : i32
    return %c0_i32, %arg0 : i32, i32
  }
  func.func @transform_1(%arg0: i32) -> (i32, i32) {
    %c0_i32 = arith.constant 0 : i32
    %c0_i32_0 = arith.constant 0 : i32
    %c0_i32_1 = arith.constant 0 : i32
    return %c0_i32, %c0_i32_0 : i32, i32
  }
}

</mosaic_0001>

<llo_original>
// kernel: tpu_custom_call.1
$region0: #{tpu_custom_call.1}
  #allocation0 [shape = 'u32[]', space=smem, size = 0x4, offset = 0x4, fixed_abs, tag = 'smem constant byte address 0x4 - core index']
  #allocation1 [shape = 'u32[144,128]{1,0:T(1,128)}', space=vmem, size = 0x12000, scoped, tag = 'internal scratch']
  %s0 = inlined_call_operand.hbm [shape: bf16[8,1024], index: 0, kind: input, shape index: {}]
  %s1 = inlined_call_operand.hbm [shape: f32[8,8], index: 1, kind: output, shape index: {}]
  %s2 = sld [smem:[#allocation0]]
  $region22: #{tpu_custom_call.1} parent=0
    _
  %s4 = ssub.s32 1, %s2
  %s5 = scalar_select 0, %s4, %s2
  $region1: #{tpu_custom_call.1} parent=0
    #allocation2 [shape = 'u8[16384]{0}', space=vmem, size = 0x4000, scoped, tag = 'input window, operand 0, single buffered']
    #allocation3 [shape = 's32[1]{0}', space=sflag, size = 0x4, scoped, tag = 'scoped memory for tpu_custom_call.1']
    #allocation4 [shape = 's32[1]{0}', space=sflag, size = 0x4, scoped, tag = 'scoped memory for tpu_custom_call.1']
    #allocation5 [shape = 'u8[4096]{0}', space=vmem, size = 0x1000, scoped, tag = 'output window, operand 0, single buffered']
    %6 = vsyncpa [#allocation3], 0
    %7 = vsyncpa [#allocation4], 0
    // Predicated region
    $region2: #{tpu_custom_call.1} parent=1 // pred_check
      _
    $region3: #{tpu_custom_call.1} parent=1 // pred_check_branch
      %9 = sbr.rel (0) target = $region5
    $region4: #{tpu_custom_call.1} parent=1 // pred_region
      %s11 = ssub.s32 512, 512
      %12 = vsyncadd [#allocation3], %s11
      %s14 = sshll.u32 [#allocation2], 4
      %s15 = int_to_ptr.vmem [resolvable:$true] %s14
      %17 = dma.hbm_to_vmem [thread:$0]  %s0, 512, %s15, [#allocation3]
    $region5: #{tpu_custom_call.1} parent=1 // pred_fallthru
      _
    // Predicated region
    $region6: #{tpu_custom_call.1} parent=1 // pred_check
      _
    $region7: #{tpu_custom_call.1} parent=1 // pred_check_branch
      %19 = sbr.rel (0) target = $region9
    $region8: #{tpu_custom_call.1} parent=1 // pred_region
      %20 = dma.done [#allocation3], 512
    $region9: #{tpu_custom_call.1} parent=1 // pred_fallthru
      _
    %p22 = scmp.eq.s32.totalorder 0, 0
    // Predicated region
    $region10: #{tpu_custom_call.1} parent=1 // pred_check
      %p23 = pneg %p22
    $region11: #{tpu_custom_call.1} parent=1 // pred_check_branch
      %25 = sbr.rel (%p23) target = $region13
    $region12: #{tpu_custom_call.1} parent=1 // pred_region
      %vm26 = vcmask 64512
      %27 = vst.msk [vmem:[#allocation5] sm:$0xff] %vm26, 0.0
    $region13: #{tpu_custom_call.1} parent=1 // pred_fallthru
      _
    %v28 = vld [vmem:[#allocation2] sm:$0xff]
    %v29 = vld [vmem:[#allocation2 + $0x8] sm:$0xff]
    %v30 = vld [vmem:[#allocation2 + $0x10] sm:$0xff]
    %v31 = vld [vmem:[#allocation2 + $0x18] sm:$0xff]
    %v32 = vld [vmem:[#allocation5] sm:$0xff]
    %v37 = vunpack.c.l.b16 %v28
    %v38 = vunpack.c.h.b16 %v28
    %v39 = vunpack.c.l.b16 %v29
    %v40 = vunpack.c.h.b16 %v29
    %v41 = vunpack.c.l.b16 %v30
    %v42 = vunpack.c.h.b16 %v30
    %v43 = vunpack.c.l.b16 %v31
    %v44 = vunpack.c.h.b16 %v31
    %v45 = vpack.c.b16 %v37, %v37
    %v46 = vpack.c.b16 %v38, %v38
    %v47 = vpack.c.b16 %v39, %v39
    %v48 = vpack.c.b16 %v40, %v40
    %v49 = vpack.c.b16 %v41, %v41
    %v50 = vpack.c.b16 %v42, %v42
    %v51 = vpack.c.b16 %v43, %v43
    %v52 = vpack.c.b16 %v44, %v44
    %61 = vmatprep.subr.bf16.mxu0 %v46
    %62 = vmatpush1.bf16.xpose.msra.mxu0 %v45
    %63 = vmatprep.subr.bf16.mxu0 0
    %64 = vmatpush1.bf16.xpose.msra.mxu0 0
    %65 = vmatprep.subr.bf16.mxu0 0
    %66 = vmatpush1.bf16.xpose.msra.mxu0 0
    %67 = vmatprep.subr.bf16.mxu0 0
    %68 = vmatpush1.bf16.xpose.msra.mxu0 0
    %69 = vmatprep.subr.bf16.mxu0 0
    %70 = vmatpush1.bf16.xpose.msra.mxu0 0
    %71 = vmatprep.subr.bf16.mxu0 0
    %72 = vmatpush1.bf16.xpose.msra.mxu0 0
    %73 = vmatprep.subr.bf16.mxu0 0
    %74 = vmatpush1.bf16.xpose.msra.mxu0 0
    %75 = vmatprep.subr.bf16.mxu0 0
    %76 = vmatpush1.bf16.xpose.msra.mxu0 0
    %77 = vmatprep.subr.bf16.mxu0 0
    %78 = vmatpush1.bf16.xpose.msra.mxu0 0
    %79 = vmatprep.subr.bf16.mxu0 0
    %80 = vmatpush1.bf16.xpose.msra.mxu0 0
    %81 = vmatprep.subr.bf16.mxu0 0
    %82 = vmatpush1.bf16.xpose.msra.mxu0 0
    %83 = vmatprep.subr.bf16.mxu0 0
    %84 = vmatpush1.bf16.xpose.msra.mxu0 0
    %85 = vmatprep.subr.bf16.mxu0 0
    %86 = vmatpush1.bf16.xpose.msra.mxu0 0
    %87 = vmatprep.subr.bf16.mxu0 0
    %88 = vmatpush1.bf16.xpose.msra.mxu0 0
    %89 = vmatprep.subr.bf16.mxu0 0
    %90 = vmatpush1.bf16.xpose.msra.mxu0 0
    %91 = vmatprep.subr.bf16.mxu0 0
    %92 = vmatpush1.bf16.xpose.msra.mxu0 0
    %93 = vmatprep.mubr.bf16.mxu0 %v46
    %94 = vmatmul.mubr.bf16.gmra.mrb[0].mxu0 %v45
    %v95 = vpop.f32.mrb[0].mxu0
    %v96 = vadd.f32 0.0, %v95
    %v97 = vpop.f32.mrb[0].mxu0
    %v98 = vpop.f32.mrb[0].mxu0
    %v99 = vpop.f32.mrb[0].mxu0
    %100 = vdwg.mxu0
    %101 = vmatprep.subr.bf16.mxu0 %v48
    %102 = vmatpush1.bf16.xpose.msra.mxu0 %v47
    %103 = vmatprep.subr.bf16.mxu0 0
    %104 = vmatpush1.bf16.xpose.msra.mxu0 0
    %105 = vmatprep.subr.bf16.mxu0 0
    %106 = vmatpush1.bf16.xpose.msra.mxu0 0
    %107 = vmatprep.subr.bf16.mxu0 0
    %108 = vmatpush1.bf16.xpose.msra.mxu0 0
    %109 = vmatprep.subr.bf16.mxu0 0
    %110 = vmatpush1.bf16.xpose.msra.mxu0 0
    %111 = vmatprep.subr.bf16.mxu0 0
    %112 = vmatpush1.bf16.xpose.msra.mxu0 0
    %113 = vmatprep.subr.bf16.mxu0 0
    %114 = vmatpush1.bf16.xpose.msra.mxu0 0
    %115 = vmatprep.subr.bf16.mxu0 0
    %116 = vmatpush1.bf16.xpose.msra.mxu0 0
    %117 = vmatprep.subr.bf16.mxu0 0
    %118 = vmatpush1.bf16.xpose.msra.mxu0 0
    %119 = vmatprep.subr.bf16.mxu0 0
    %120 = vmatpush1.bf16.xpose.msra.mxu0 0
    %121 = vmatprep.subr.bf16.mxu0 0
    %122 = vmatpush1.bf16.xpose.msra.mxu0 0
    %123 = vmatprep.subr.bf16.mxu0 0
    %124 = vmatpush1.bf16.xpose.msra.mxu0 0
    %125 = vmatprep.subr.bf16.mxu0 0
    %126 = vmatpush1.bf16.xpose.msra.mxu0 0
    %127 = vmatprep.subr.bf16.mxu0 0
    %128 = vmatpush1.bf16.xpose.msra.mxu0 0
    %129 = vmatprep.subr.bf16.mxu0 0
    %130 = vmatpush1.bf16.xpose.msra.mxu0 0
    %131 = vmatprep.subr.bf16.mxu0 0
    %132 = vmatpush1.bf16.xpose.msra.mxu0 0
    %133 = vmatprep.mubr.bf16.mxu0 %v48
    %134 = vmatmul.mubr.bf16.gmra.mrb[0].mxu0 %v47
    %v135 = vpop.f32.mrb[0].mxu0
    %v136 = vadd.f32 %v96, %v135
    %v137 = vpop.f32.mrb[0].mxu0
    %v138 = vpop.f32.mrb[0].mxu0
    %v139 = vpop.f32.mrb[0].mxu0
    %140 = vdwg.mxu0
    %141 = vmatprep.subr.bf16.mxu0 %v50
    %142 = vmatpush1.bf16.xpose.msra.mxu0 %v49
    %143 = vmatprep.subr.bf16.mxu0 0
    %144 = vmatpush1.bf16.xpose.msra.mxu0 0
    %145 = vmatprep.subr.bf16.mxu0 0
    %146 = vmatpush1.bf16.xpose.msra.mxu0 0
    %147 = vmatprep.subr.bf16.mxu0 0
    %148 = vmatpush1.bf16.xpose.msra.mxu0 0
    %149 = vmatprep.subr.bf16.mxu0 0
    %150 = vmatpush1.bf16.xpose.msra.mxu0 0
    %151 = vmatprep.subr.bf16.mxu0 0
    %152 = vmatpush1.bf16.xpose.msra.mxu0 0
    %153 = vmatprep.subr.bf16.mxu0 0
    %154 = vmatpush1.bf16.xpose.msra.mxu0 0
    %155 = vmatprep.subr.bf16.mxu0 0
    %156 = vmatpush1.bf16.xpose.msra.mxu0 0
    %157 = vmatprep.subr.bf16.mxu0 0
    %158 = vmatpush1.bf16.xpose.msra.mxu0 0
    %159 = vmatprep.subr.bf16.mxu0 0
    %160 = vmatpush1.bf16.xpose.msra.mxu0 0
    %161 = vmatprep.subr.bf16.mxu0 0
    %162 = vmatpush1.bf16.xpose.msra.mxu0 0
    %163 = vmatprep.subr.bf16.mxu0 0
    %164 = vmatpush1.bf16.xpose.msra.mxu0 0
    %165 = vmatprep.subr.bf16.mxu0 0
    %166 = vmatpush1.bf16.xpose.msra.mxu0 0
    %167 = vmatprep.subr.bf16.mxu0 0
    %168 = vmatpush1.bf16.xpose.msra.mxu0 0
    %169 = vmatprep.subr.bf16.mxu0 0
    %170 = vmatpush1.bf16.xpose.msra.mxu0 0
    %171 = vmatprep.subr.bf16.mxu0 0
    %172 = vmatpush1.bf16.xpose.msra.mxu0 0
    %173 = vmatprep.mubr.bf16.mxu0 %v50
    %174 = vmatmul.mubr.bf16.gmra.mrb[0].mxu0 %v49
    %v175 = vpop.f32.mrb[0].mxu0
    %v176 = vadd.f32 %v136, %v175
    %v177 = vpop.f32.mrb[0].mxu0
    %v178 = vpop.f32.mrb[0].mxu0
    %v179 = vpop.f32.mrb[0].mxu0
    %180 = vdwg.mxu0
    %181 = vmatprep.subr.bf16.mxu0 %v52
    %182 = vmatpush1.bf16.xpose.msra.mxu0 %v51
    %183 = vmatprep.subr.bf16.mxu0 0
    %184 = vmatpush1.bf16.xpose.msra.mxu0 0
    %185 = vmatprep.subr.bf16.mxu0 0
    %186 = vmatpush1.bf16.xpose.msra.mxu0 0
    %187 = vmatprep.subr.bf16.mxu0 0
    %188 = vmatpush1.bf16.xpose.msra.mxu0 0
    %189 = vmatprep.subr.bf16.mxu0 0
    %190 = vmatpush1.bf16.xpose.msra.mxu0 0
    %191 = vmatprep.subr.bf16.mxu0 0
    %192 = vmatpush1.bf16.xpose.msra.mxu0 0
    %193 = vmatprep.subr.bf16.mxu0 0
    %194 = vmatpush1.bf16.xpose.msra.mxu0 0
    %195 = vmatprep.subr.bf16.mxu0 0
    %196 = vmatpush1.bf16.xpose.msra.mxu0 0
    %197 = vmatprep.subr.bf16.mxu0 0
    %198 = vmatpush1.bf16.xpose.msra.mxu0 0
    %199 = vmatprep.subr.bf16.mxu0 0
    %200 = vmatpush1.bf16.xpose.msra.mxu0 0
    %201 = vmatprep.subr.bf16.mxu0 0
    %202 = vmatpush1.bf16.xpose.msra.mxu0 0
    %203 = vmatprep.subr.bf16.mxu0 0
    %204 = vmatpush1.bf16.xpose.msra.mxu0 0
    %205 = vmatprep.subr.bf16.mxu0 0
    %206 = vmatpush1.bf16.xpose.msra.mxu0 0
    %207 = vmatprep.subr.bf16.mxu0 0
    %208 = vmatpush1.bf16.xpose.msra.mxu0 0
    %209 = vmatprep.subr.bf16.mxu0 0
    %210 = vmatpush1.bf16.xpose.msra.mxu0 0
    %211 = vmatprep.subr.bf16.mxu0 0
    %212 = vmatpush1.bf16.xpose.msra.mxu0 0
    %213 = vmatprep.mubr.bf16.mxu0 %v52
    %214 = vmatmul.mubr.bf16.gmra.mrb[0].mxu0 %v51
    %v215 = vpop.f32.mrb[0].mxu0
    %v216 = vadd.f32 %v176, %v215
    %v217 = vpop.f32.mrb[0].mxu0
    %v218 = vpop.f32.mrb[0].mxu0
    %v219 = vpop.f32.mrb[0].mxu0
    %220 = vdwg.mxu0
    %v221 = vadd.f32 %v32, %v216
    %vm222 = vcmask 64512
    %223 = vst.msk [vmem:[#allocation5] sm:$0xff] %vm222, %v221
    // Predicated region
    $region14: #{tpu_custom_call.1} parent=1 // pred_check
      _
    $region15: #{tpu_custom_call.1} parent=1 // pred_check_branch
      %225 = sbr.rel (0) target = $region17
    $region16: #{tpu_custom_call.1} parent=1 // pred_region
      %s227 = ssub.s32 128, 128
      %228 = vsyncadd [#allocation4], %s227
      %s230 = sshll.u32 [#allocation5], 4
      %s231 = int_to_ptr.vmem [resolvable:$true] %s230
      %233 = dma.vmem_to_hbm [thread:$0]  %s231, 128, %s1, [#allocation4]
    $region17: #{tpu_custom_call.1} parent=1 // pred_fallthru
      _
    // Predicated region
    $region18: #{tpu_custom_call.1} parent=1 // pred_check
      _
    $region19: #{tpu_custom_call.1} parent=1 // pred_check_branch
      %235 = sbr.rel (0) target = $region21
    $region20: #{tpu_custom_call.1} parent=1 // pred_region
      %236 = dma.done [#allocation4], 128
    $region21: #{tpu_custom_call.1} parent=1 // pred_fallthru
      _
    %237 = vsyncpa [#allocation3], 1
    %238 = vsyncpa [#allocation4], 1

</llo_original>
